<compile_context>
chip_gen: v5e
topology: v5e:2x2
jax: 0.10.0
libtpu: 0.0.40
codegen_flags: <defaults>
</compile_context>

<pallas_src>
import jax
import jax.numpy as jnp
from jax import lax
from jax.experimental import pallas as pl
from jax.experimental.pallas import tpu as pltpu


def _round_up(x, m):
    return ((x + m - 1) // m) * m


# ----------------------------- Pallas kernels (hot path) -----------------------------

def _shape_blend_kernel(beta_ref, bstd_ref, out_ref):
    # beta_ref: (B, 10)   bstd_ref: (3N, 10)   out_ref: (B, 3N)
    # out = beta @ bstd^T : rhs contracted on its last dim (q @ k^T pattern), so the
    # large 3N dimension is the lane (last) dim of the output -> dense stores, and no
    # host-side transpose of b_std is materialized.
    out_ref[...] = lax.dot_general(
        beta_ref[...], bstd_ref[...],
        dimension_numbers=(((1,), (1,)), ((), ())),
        preferred_element_type=jnp.float32)


def shape_blend(pred_beta, b_std_flat):
    """out[b] = b_std_flat @ pred_beta[b], laid out as (B, 3N) float32, one launch."""
    B, S = pred_beta.shape
    M = b_std_flat.shape[0]
    cost = pl.CostEstimate(flops=2 * B * S * M, transcendentals=0,
                           bytes_accessed=4 * (B * S + M * S + B * M))
    return pl.pallas_call(
        _shape_blend_kernel,
        out_shape=jax.ShapeDtypeStruct((B, M), jnp.float32),
        cost_estimate=cost,
    )(pred_beta.astype(jnp.float32), b_std_flat.astype(jnp.float32))


def _cross_cov_kernel(at_ref, b_ref, h_ref):
    # at_ref: (M, 3, n)   b_ref: (M, n, 3)   h_ref: (M, 3, 3);  H[m] = at[m] @ b[m].
    # M is tiny and static (num_joints * batch); a static unrolled loop of 2-D dots is
    # the safest lowering and keeps everything in a single pallas_call launch.
    for m in range(at_ref.shape[0]):
        h_ref[m] = jnp.dot(at_ref[m], b_ref[m], preferred_element_type=jnp.float32)


def batched_cross_cov(a, b):
    """H[i] = a[i].T @ b[i];  a, b: (M, n, d) -> (M, d, d).  One launch for every
    (joint, batch) pair -- the per-joint pallas_calls of the previous version were
    pure launch/DMA overhead for 3x3 outputs."""
    M, n, d = a.shape
    at = jnp.swapaxes(a, -1, -2).astype(jnp.float32)   # tiny (M, d, n); negligible copy
    cost = pl.CostEstimate(flops=2 * M * n * d * d, transcendentals=0,
                           bytes_accessed=4 * (2 * M * n * d + M * d * d))
    return pl.pallas_call(
        _cross_cov_kernel,
        out_shape=jax.ShapeDtypeStruct((M, d, d), jnp.float32),
        cost_estimate=cost,
    )(at, b.astype(jnp.float32))


def _gram_kernel(d_ref, g_ref):
    # d_ref: (1, Rp, Cp)   g_ref: (1, Cp, Cp);  G = D^T D.
    # The transpose happens in VMEM (XLU) so the HBM copy of D is read exactly once,
    # and Cp (multiple of 128) keeps every output store lane-dense / unmasked.
    d = d_ref[0]
    g_ref[0] = jnp.dot(d.T, d, preferred_element_type=jnp.float32)


def batched_gram(d):
    """G[i] = d[i].T @ d[i];  d: (B, R, C) -> (B, C, C) (unpadded slice returned)."""
    B, R, C = d.shape
    Rp = _round_up(R, 8)
    Cp = _round_up(C, 128)
    dp = jnp.pad(d.astype(jnp.float32), ((0, 0), (0, Rp - R), (0, Cp - C)))
    cost = pl.CostEstimate(flops=2 * B * Rp * Cp * Cp, transcendentals=0,
                           bytes_accessed=4 * B * (Rp * Cp + Cp * Cp))
    g = pl.pallas_call(
        _gram_kernel,
        out_shape=jax.ShapeDtypeStruct((B, Cp, Cp), jnp.float32),
        grid=(B,),
        in_specs=[pl.BlockSpec((1, Rp, Cp), lambda b: (b, 0, 0))],
        out_specs=pl.BlockSpec((1, Cp, Cp), lambda b: (b, 0, 0)),
        # NOTE: on v7x this batch axis could be pltpu.CORE_PARALLEL to shard the two
        # TensorCores; "parallel" is kept since it is a safe no-op on v5e/v6e.
        # Per-step VMEM (double-buffered): ~2*(Rp*Cp + Cp*Cp)*4 B -- a few MB even at
        # full SMPL sizes, well within the 32 MiB scoped default on all generations.
        compiler_params=pltpu.CompilerParams(dimension_semantics=("parallel",)),
        cost_estimate=cost,
    )(dp)
    return g[:, :C, :C]


# ----------------------------- rotation helpers (plain JAX) -----------------------------

def rodrigues_smpl(r):
    """r: (M, 1, 3) axis-angle -> (M, 3, 3) rotation matrices (SMPL-style Rodrigues)."""
    eps = 1e-8
    theta = jnp.linalg.norm(r + eps, axis=(1, 2), keepdims=True)      # (M,1,1)
    r_hat = r / theta                                                 # (M,1,3)
    cos = jnp.cos(theta)
    z = jnp.zeros((r.shape[0], 1), dtype=r.dtype)
    rx, ry, rz = r_hat[:, 0, 0:1], r_hat[:, 0, 1:2], r_hat[:, 0, 2:3]
    m = jnp.concatenate([z, -rz, ry, rz, z, -rx, -ry, rx, z], axis=1).reshape(-1, 3, 3)
    i3 = jnp.eye(3, dtype=r.dtype)[None]
    outer = jnp.transpose(r_hat, (0, 2, 1)) @ r_hat                   # (M,3,3)
    return cos * i3 + (1.0 - cos) * outer + jnp.sin(theta) * m


def _sqrt_positive_part(x):
    return jnp.sqrt(jnp.maximum(x, 0.0))


def matrix_to_quaternion(M):
    m00, m11, m22 = M[..., 0, 0], M[..., 1, 1], M[..., 2, 2]
    q_abs = _sqrt_positive_part(jnp.stack([
        1.0 + m00 + m11 + m22,
        1.0 + m00 - m11 - m22,
        1.0 - m00 + m11 - m22,
        1.0 - m00 - m11 + m22], axis=-1))
    quat_by_rijk = jnp.stack([
        jnp.stack([q_abs[..., 0] ** 2, M[..., 2, 1] - M[..., 1, 2],
                   M[..., 0, 2] - M[..., 2, 0], M[..., 1, 0] - M[..., 0, 1]], -1),
        jnp.stack([M[..., 2, 1] - M[..., 1, 2], q_abs[..., 1] ** 2,
                   M[..., 1, 0] + M[..., 0, 1], M[..., 0, 2] + M[..., 2, 0]], -1),
        jnp.stack([M[..., 0, 2] - M[..., 2, 0], M[..., 1, 0] + M[..., 0, 1],
                   q_abs[..., 2] ** 2, M[..., 2, 1] + M[..., 1, 2]], -1),
        jnp.stack([M[..., 1, 0] - M[..., 0, 1], M[..., 2, 0] + M[..., 0, 2],
                   M[..., 2, 1] + M[..., 1, 2], q_abs[..., 3] ** 2], -1),
    ], axis=-2)
    quat_candidates = quat_by_rijk / (2.0 * jnp.maximum(q_abs[..., None], 0.1))
    best = jnp.argmax(q_abs, axis=-1)
    onehot = jax.nn.one_hot(best, 4, dtype=M.dtype)[..., None]
    return jnp.sum(quat_candidates * onehot, axis=-2)


def quaternion_to_axis_angle(q):
    norms = jnp.linalg.norm(q[..., 1:], axis=-1, keepdims=True)
    half_angles = jnp.arctan2(norms, q[..., :1])
    angles = 2.0 * half_angles
    eps = 1e-6
    small = jnp.abs(angles) < eps
    safe_angles = jnp.where(small, 1.0, angles)
    sin_half_over_angles = jnp.where(small, 0.5 - angles * angles / 48.0,
                                     jnp.sin(half_angles) / safe_angles)
    return q[..., 1:] / sin_half_over_angles


def matrix_to_axis_angle(M):
    return quaternion_to_axis_angle(matrix_to_quaternion(M))


# ----------------------------- PLIKS linear solve -----------------------------

def solve_lstq(uv_curr, xm_, b_s_, blend_curr, W, m00, m11, m02, m12,
               key_size, A_size, valid_R_list_stack, pred_beta, lambda_factor=1.0):
    B = uv_curr.shape[0]
    n = xm_.shape[2]
    cols = key_size * 6 + 10

    du = (m02[:, None] - uv_curr[..., 0])[:, None]      # (B,1,n)
    dv = (m12[:, None] - uv_curr[..., 1])[:, None]      # (B,1,n)
    f0 = m00[:, None, None]                             # (B,1,1)
    f1 = m11[:, None, None]
    bT = blend_curr.T[None]                             # (1,ks,n)

    zeros_bkn = jnp.zeros((B, key_size, n), dtype=jnp.float32)
    x1 = du * xm_[..., 1]
    x2 = f0 * xm_[..., 2] + du * (-xm_[..., 0])
    x3 = f0 * (-xm_[..., 1])
    x4a = f0[..., None] * b_s_[:, :, :, 0] + du[..., None] * b_s_[:, :, :, 2]
    x8 = bT * f0
    x10 = bT * du
    y1 = f1 * (-xm_[..., 2]) + dv * xm_[..., 1]
    y2 = dv * (-xm_[..., 0])
    y3 = f1 * xm_[..., 0]
    y4a = f1[..., None] * b_s_[:, :, :, 1] + dv[..., None] * b_s_[:, :, :, 2]
    y9 = bT * f1
    y10 = bT * dv
    b1 = -f0 * xm_[..., 0] - du * xm_[..., 2]
    b2 = -f1 * xm_[..., 1] - dv * xm_[..., 2]

    A1 = jnp.stack([x1, x2, x3, x8, zeros_bkn, x10], axis=-1)          # (B,ks,n,6)
    A2 = jnp.stack([y1, y2, y3, zeros_bkn, y9, y10], axis=-1)
    A1 = jnp.transpose(A1, (0, 2, 1, 3)).reshape(B, n, key_size * 6)
    A2 = jnp.transpose(A2, (0, 2, 1, 3)).reshape(B, n, key_size * 6)
    A1_ = jnp.concatenate([W[..., None] * A1, W[..., None] * A2], axis=1)          # (B,2n,6ks)
    A2_ = jnp.concatenate([W[..., None] * x4a.sum(1), W[..., None] * y4a.sum(1)], axis=1)
    b_ = jnp.concatenate([W * b1.sum(1), W * b2.sum(1)], axis=1)                   # (B,2n)

    # Only the 2n data rows of the full [A | b] system carry data; the rotation /
    # translation regularizer rows are all-zero and the beta regularizer rows are
    # lam * I_10 (rhs lam * beta).  So the Gram of the full system is the Gram of the
    # data block plus an analytic lam^2 correction: no zero-filled (B, rows, cols) A,
    # no scattered .at[].set writes, and a contraction over 2n rows only.
    # TODO(synk): the elementwise assembly above (x1..y10 / transposes / concats) could
    # be fused into the Gram kernel itself (per-batch D fits VMEM easily); kept in XLA.
    D = jnp.concatenate([A1_, A2_, b_[..., None]], axis=-1)            # (B, 2n, cols+1)
    G = batched_gram(D)                                                # Pallas (B, cols+1, cols+1)

    lam = jnp.exp(jnp.log(jnp.float32(1.0) / 3.0) * lambda_factor).astype(jnp.float32)
    lam2 = lam * lam
    AtA = G[:, :cols, :cols]
    Atb = G[:, :cols, cols]
    beta_diag = jnp.arange(cols - 10, cols)
    AtA = AtA.at[:, beta_diag, beta_diag].add(lam2)
    Atb = Atb.at[:, cols - 10:].add(lam2 * pred_beta)

    # Normal-equations solve (torch.linalg.lstsq equivalent for full column rank).
    # A tiny relative jitter keeps AtA well posed when W ~ 0 for a joint group.
    # TODO(synk): a rank-revealing lstsq (SVD/QR) has no clean Pallas equivalent.
    diag_mean = jnp.mean(jnp.diagonal(AtA, axis1=-2, axis2=-1), axis=-1)
    AtA = AtA + (1e-6 * diag_mean)[:, None, None] * jnp.eye(cols, dtype=jnp.float32)
    solution = jnp.linalg.solve(AtA, Atb[..., None])[..., 0]          # (B, cols)

    sol_rt = solution[:, :6 * key_size].reshape(B, key_size, 6)
    rot_aa = sol_rt[..., :3].reshape(-1, 3)[:, None, :]               # (B*ks, 1, 3)
    r_pred = rodrigues_smpl(rot_aa).reshape(B, key_size, 3, 3)
    t_pred = sol_rt[..., 3:6]                                         # (B, ks, 3)

    rt_pred = jnp.tile(jnp.eye(4, dtype=jnp.float32)[None, None], (B, key_size, 1, 1))
    rt_pred = rt_pred.at[:, :, :3, :3].set(r_pred)
    r_curr = rt_pred @ valid_R_list_stack
    beta = solution[:, -10:]
    return r_curr, t_pred, beta, r_pred


# ----------------------------- PLIKS forward -----------------------------

def pliks_forward(params, pred_uvdw, pred_beta, pred_depth, pred_trans, K_fix, K_img,
                  sparse=True, lambda_factor=1.0, use_mean_shape=False,
                  run_iters=2, run_pliks=True):
    x_mean = params["x_mean"]            # (N, 3)
    b_std = params["b_std"]              # (N, 3, 10)
    blend_w = params["blend_w"]          # (N, nj)
    kin_list = params["kin_list"]        # {joint: vertex indices}
    parent = params["parent"]
    kintree_num = params["kintree_num"]
    shapedirs = params["shapedirs"]      # (V, 3, 10)
    v_template = params["v_template"]    # (V, 3)
    J_regressor = params["J_regressor"]  # (nj, V)

    B = pred_uvdw.shape[0]
    N = x_mean.shape[0]
    K = K_fix
    K1 = K[:, jnp.array([0, 1, 3])][:, :, jnp.array([0, 1, 2])]  # (B,3,3)
    K_out = K_img if run_pliks else K_fix

    # ---- shape blend (Pallas, one lane-dense launch) ----
    b_std_flat = b_std.reshape(-1, 10)                            # (3N, 10)
    x_mean_std = shape_blend(pred_beta, b_std_flat).reshape(B, N, 3) + x_mean[None]

    K1_inv = jnp.linalg.inv(K1)

    # ---- per-joint Procrustes: assemble all joints, then ONE cross-cov launch ----
    kin_keys = [k for k, v in kin_list.items() if v is not None]
    key_size = len(kin_keys)
    n_sizes = [len(kin_list[k]) for k in kin_keys]
    n_max = max(n_sizes)
    A_size = 0
    kin_data = {}
    Ac_list, Bc_list = [], []
    for key in kin_keys:
        indices = kin_list[key]
        idx = jnp.asarray(indices, dtype=jnp.int32)
        n_k = len(indices)
        uv_curr = pred_uvdw[:, idx, :2]
        depth_curr = pred_uvdw[:, idx, 2] + pred_depth[:, None]
        if sparse:
            W_curr = pred_uvdw[:, idx, 3] * 0.95 + 0.05
        else:
            W_curr = jnp.clip(pred_uvdw[:, idx, 3], 0.02, 1.0)
        x_m_curr = x_mean[idx]
        x_m_std_curr = x_mean_std[:, idx]
        b_std_curr = b_std[idx]
        blend_curr_a = blend_w[idx, :]

        ones = jnp.ones((uv_curr.shape[0], uv_curr.shape[1], 1), dtype=jnp.float32)
        uvd = jnp.concatenate([uv_curr, ones], -1)                       # (B,n,3)
        uvd_curr = jnp.einsum('bij,bnj->bni', K1_inv, uvd)
        uvd_curr = (uvd_curr / uvd_curr[..., -1:])[..., :3] * depth_curr[..., None]

        uv_c = uvd_curr - uvd_curr.mean(axis=1, keepdims=True)
        xm_c = x_m_std_curr - x_m_std_curr.mean(axis=1, keepdims=True)
        bk = blend_curr_a[:, key][:, None]                               # (n,1)
        A_c = W_curr[..., None] * uv_c * bk
        B_c = xm_c * bk
        if n_k < n_max:   # zero rows do not change A^T B
            pad = ((0, 0), (0, n_max - n_k), (0, 0))
            A_c = jnp.pad(A_c, pad)
            B_c = jnp.pad(B_c, pad)
        Ac_list.append(A_c)
        Bc_list.append(B_c)
        A_size += n_k
        kin_data[key] = (x_m_curr, b_std_curr, uv_curr, blend_curr_a, W_curr)

    Ac = jnp.stack(Ac_list, axis=0).reshape(key_size * B, n_max, 3)
    Bc = jnp.stack(Bc_list, axis=0).reshape(key_size * B, n_max, 3)
    H = batched_cross_cov(Ac, Bc).reshape(key_size, B, 3, 3)             # Pallas, 1 launch

    # Batched SVD / sign-fix / RT for every joint at once.
    U, S, Vh = jnp.linalg.svd(H)
    V = jnp.swapaxes(Vh, -1, -2)
    R = V @ jnp.swapaxes(U, -1, -2)
    det_r = jnp.linalg.det(R) < 0                                         # (ks, B)
    last_col = (jnp.arange(3) == 2)[None, None, None, :]
    sign = jnp.where(det_r[..., None, None] & last_col, -1.0, 1.0)
    V = V * sign
    R = V @ jnp.swapaxes(U, -1, -2)
    RT_all = jnp.tile(jnp.eye(4, dtype=jnp.float32)[None, None], (key_size, B, 1, 1))
    RT_all = RT_all.at[..., :3, :3].set(jnp.swapaxes(R, -1, -2))          # (ks, B, 4, 4)

    if run_pliks:
        valid_R_list_stack = jnp.transpose(RT_all, (1, 0, 2, 3))          # (B,ks,4,4)
        Kflat = K_out[:, jnp.array([0, 1, 3])].reshape(B, -1)             # (B,12)
        m00, m02 = Kflat[:, 0], Kflat[:, 2]
        m11, m12 = Kflat[:, 5], Kflat[:, 6]

        r_curr = None
        t_pred = None
        pred_beta_anal = None
        for _ in range(run_iters):
            if r_curr is not None:
                valid_R_list_stack = r_curr
            xm_list, bs_list, uv_list, w_list, bc_list = [], [], [], [], []
            for key in kin_keys:
                x_m_curr, b_std_curr, uv_curr, blend_curr, W_c = kin_data[key]
                n_k = x_m_curr.shape[0]
                hom = jnp.concatenate([x_m_curr, jnp.ones((n_k, 1), jnp.float32)], -1)   # (n,4)
                p2 = jnp.einsum('bkij,jn->bkin', valid_R_list_stack, hom.T)              # (B,ks,4,n)
                p2 = jnp.transpose(p2, (0, 1, 3, 2))[..., :3]                            # (B,ks,n,3)
                p1 = jnp.transpose(blend_curr, (1, 0))[None, :, :, None]                 # (1,ks,n,1)
                xm_list.append(p1 * p2)

                homB = jnp.concatenate([b_std_curr,
                                        jnp.ones((n_k, 1, 10), jnp.float32)], axis=1)
                q2 = jnp.einsum('bkij,njs->nbkis', valid_R_list_stack, homB)             # (n,B,ks,4,10)
                q1 = blend_curr[:, None, :, None, None]                                  # (n,1,ks,1,1)
                bs = jnp.transpose(q1 * q2, (1, 2, 0, 3, 4))[:, :, :, :3]                # (B,ks,n,3,10)
                bs_list.append(bs)
                uv_list.append(uv_curr)
                w_list.append(W_c)
                bc_list.append(blend_curr)
            xm_ = jnp.concatenate(xm_list, axis=2)
            b_s_ = jnp.concatenate(bs_list, axis=2)
            uv_all = jnp.concatenate(uv_list, axis=1)
            W_all = jnp.concatenate(w_list, axis=1)
            blend_all = jnp.concatenate(bc_list, axis=0)
            pred_beta_ = jnp.zeros_like(pred_beta) if use_mean_shape else pred_beta
            r_curr, t_pred, pred_beta_anal, _ = solve_lstq(
                uv_all, xm_, b_s_, blend_all, W_all, m00, m11, m02, m12,
                key_size, A_size, valid_R_list_stack, pred_beta_, lambda_factor)

        results = [r_curr[:, 0, :3, :3]]
        for i in range(1, kintree_num):
            results.append(jnp.swapaxes(r_curr[:, parent[i], :3, :3], -1, -2)
                           @ r_curr[:, i, :3, :3])
        results = jnp.stack(results, axis=0).transpose(1, 0, 2, 3)        # (B,nj,3,3)
        v_shaped = jnp.tensordot(pred_beta_anal, shapedirs, axes=([1], [2])) + v_template
        J = jnp.einsum('jv,bvc->bjc', J_regressor, v_shaped)
        trans_pred = t_pred[:, 0] - (J[:, 0] - (results[:, 0] @ J[:, 0][..., None])[..., 0])
        pred_beta_out = pred_beta_anal
        pred_pose = matrix_to_axis_angle(results).reshape(B, -1)
    else:
        r_curr = jnp.transpose(RT_all, (1, 0, 2, 3))[..., :3, :3]
        r_curr = r_curr.reshape(-1, kintree_num, 3, 3)
        results = [r_curr[:, 0]]
        for i in range(1, kintree_num):
            results.append(jnp.swapaxes(r_curr[:, parent[i]], -1, -2) @ r_curr[:, i])
        results = jnp.stack(results, 0).transpose(1, 0, 2, 3)
        pred_pose = matrix_to_axis_angle(results).reshape(B, -1)
        trans_pred = jnp.concatenate([pred_trans, pred_depth[..., None]], -1)
        pred_beta_out = pred_beta

    return pred_pose, pred_beta_out, trans_pred, K_out


# ----------------------------- main -----------------------------

if __name__ == "__main__":
    key = jax.random.PRNGKey(0)
    ks = jax.random.split(key, 16)

    B, N, NJ, NPK = 2, 64, 4, 16      # batch, sparse vertices, joints, verts per joint group
    fx, fy, cx, cy = 200.0, 200.0, 112.0, 112.0

    def make_K(fx_, fy_, cx_, cy_):
        Km = jnp.array([[fx_, 0.0, cx_, 0.0],
                        [0.0, fy_, cy_, 0.0],
                        [0.0, 0.0, 0.0, 1.0],
                        [0.0, 0.0, 1.0, 0.0]], dtype=jnp.float32)
        return jnp.tile(Km[None], (B, 1, 1))

    K_fix = make_K(fx, fy, cx, cy)
    K_img = make_K(fx * 1.05, fy * 1.05, cx + 2.0, cy - 2.0)

    uv = jnp.stack([cx + 30.0 * jax.random.normal(ks[0], (B, N)),
                    cy + 30.0 * jax.random.normal(ks[1], (B, N))], -1)
    d = 0.05 * jax.random.normal(ks[2], (B, N))
    w = jax.random.uniform(ks[3], (B, N))
    pred_uvdw = jnp.concatenate([uv, d[..., None], w[..., None]], -1).astype(jnp.float32)
    pred_beta = (0.5 * jax.random.normal(ks[4], (B, 10))).astype(jnp.float32)
    pred_depth = (5.0 + jax.random.uniform(ks[5], (B,))).astype(jnp.float32)
    pred_trans = (0.1 * jax.random.normal(ks[6], (B, 2))).astype(jnp.float32)

    jr = jnp.abs(jax.random.normal(ks[12], (NJ, N))) + 1e-3
    params = {
        "x_mean": (0.2 * jax.random.normal(ks[7], (N, 3))).astype(jnp.float32),
        "b_std": (0.02 * jax.random.normal(ks[8], (N, 3, 10))).astype(jnp.float32),
        "blend_w": jax.nn.softmax(jax.random.normal(ks[9], (N, NJ)), axis=-1).astype(jnp.float32),
        "shapedirs": (0.01 * jax.random.normal(ks[10], (N, 3, 10))).astype(jnp.float32),
        "v_template": (0.2 * jax.random.normal(ks[11], (N, 3))).astype(jnp.float32),
        "J_regressor": (jr / jr.sum(axis=1, keepdims=True)).astype(jnp.float32),
        "kin_list": {j: list(range(j * NPK, (j + 1) * NPK)) for j in range(NJ)},
        "parent": [0, 0, 1, 2],
        "kintree_num": NJ,
    }

    pred_pose, beta_out, trans_pred, K_out = pliks_forward(
        params, pred_uvdw, pred_beta, pred_depth, pred_trans, K_fix, K_img,
        sparse=True, lambda_factor=1.0, use_mean_shape=False, run_iters=2, run_pliks=True)

    jax.block_until_ready((pred_pose, beta_out, trans_pred, K_out))
    assert pred_pose.shape == (B, NJ * 3)
    assert beta_out.shape == (B, 10)
    assert trans_pred.shape == (B, 3)
    assert bool(jnp.all(jnp.isfinite(pred_pose)))
    assert bool(jnp.all(jnp.isfinite(trans_pred)))
    print("KERNEL_OK")
</pallas_src>

<mosaic_0001>
module attributes {stable_mosaic.version = 11 : i64} {
  func.func @_shape_blend_kernel(%arg0: memref<2x10xf32, #tpu.memory_space<vmem>>, %arg1: memref<192x10xf32, #tpu.memory_space<vmem>>, %arg2: memref<2x192xf32, #tpu.memory_space<vmem>>) attributes {dimension_semantics = [], scalar_prefetch = 0 : i64, scratch_operands = 0 : i64, tpu.core_type = #tpu.core_type<tc>} {
    %c0 = arith.constant 0 : index
    %c0_0 = arith.constant 0 : index
    %0 = vector.load %arg0[%c0, %c0_0] : memref<2x10xf32, #tpu.memory_space<vmem>>, vector<2x10xf32>
    %c0_1 = arith.constant 0 : index
    %c0_2 = arith.constant 0 : index
    %1 = vector.load %arg1[%c0_1, %c0_2] : memref<192x10xf32, #tpu.memory_space<vmem>>, vector<192x10xf32>
    %cst = arith.constant dense<0.000000e+00> : vector<2x192xf32>
    %2 = tpu.matmul %0, %1, %cst {dimension_numbers = #tpu.dot_dimension_numbers<[1], [1], [0], [0], [0, 0, 1, 0], [], []>} : vector<2x10xf32>, vector<192x10xf32>, vector<2x192xf32> -> vector<2x192xf32>
    %c0_3 = arith.constant 0 : index
    %c0_4 = arith.constant 0 : index
    %3 = vector.load %arg2[%c0_3, %c0_4] : memref<2x192xf32, #tpu.memory_space<vmem>>, vector<2x192xf32>
    tpu.vector_store %arg2[%c0_3, %c0_4], %2 {strides = array<i32>} : memref<2x192xf32, #tpu.memory_space<vmem>>, vector<2x192xf32>,
    return
  }
}

</mosaic_0001>

<llo_original>
// kernel: tpu_custom_call.1
$region0: #{tpu_custom_call.1}
  #allocation0 [shape = 'u32[]', space=smem, size = 0x4, offset = 0x4, fixed_abs, tag = 'smem constant byte address 0x4 - core index']
  #allocation1 [shape = 'u32[72,128]{1,0:T(1,128)}', space=vmem, size = 0x9000, scoped, tag = 'internal scratch']
  %s0 = inlined_call_operand.vmem [shape: f32[2,10], index: 0, kind: input, shape index: {}]
  %s1 = inlined_call_operand.vmem [shape: f32[192,10], index: 1, kind: input, shape index: {}]
  %s2 = inlined_call_operand.hbm [shape: f32[2,192], index: 2, kind: output, shape index: {}]
  %s3 = sld [smem:[#allocation0]]
  $region18: #{tpu_custom_call.1} parent=0
    _
  %s5 = ssub.s32 1, %s3
  %s6 = scalar_select 0, %s5, %s3
  $region1: #{tpu_custom_call.1} parent=0
    #allocation2 [shape = 'u8[2048]{0}', space=vmem, size = 0x800, scoped, tag = 'output window, operand 0, single buffered']
    #allocation3 [shape = 's32[1]{0}', space=sflag, size = 0x4, scoped, tag = 'scoped memory for tpu_custom_call.1']
    %7 = vsyncpa [#allocation3], 0
    // Predicated region
    $region2: #{tpu_custom_call.1} parent=1 // pred_check
      _
    $region3: #{tpu_custom_call.1} parent=1 // pred_check_branch
      %9 = sbr.rel (0) target = $region5
    $region4: #{tpu_custom_call.1} parent=1 // pred_region
      _
    $region5: #{tpu_custom_call.1} parent=1 // pred_fallthru
      _
    // Predicated region
    $region6: #{tpu_custom_call.1} parent=1 // pred_check
      _
    $region7: #{tpu_custom_call.1} parent=1 // pred_check_branch
      %11 = sbr.rel (0) target = $region9
    $region8: #{tpu_custom_call.1} parent=1 // pred_region
      _
    $region9: #{tpu_custom_call.1} parent=1 // pred_fallthru
      _
    %v12 = vld [vmem:[%s0] sm:$0x3]
    %v13 = vld [vmem:[%s1] sm:$0xff]
    %v14 = vld [vmem:[%s1 + $0x8] sm:$0xff]
    %v15 = vld [vmem:[%s1 + $0x10] sm:$0xff]
    %v16 = vld [vmem:[%s1 + $0x18] sm:$0xff]
    %v17 = vld [vmem:[%s1 + $0x20] sm:$0xff]
    %v18 = vld [vmem:[%s1 + $0x28] sm:$0xff]
    %v19 = vld [vmem:[%s1 + $0x30] sm:$0xff]
    %v20 = vld [vmem:[%s1 + $0x38] sm:$0xff]
    %v21 = vld [vmem:[%s1 + $0x40] sm:$0xff]
    %v22 = vld [vmem:[%s1 + $0x48] sm:$0xff]
    %v23 = vld [vmem:[%s1 + $0x50] sm:$0xff]
    %v24 = vld [vmem:[%s1 + $0x58] sm:$0xff]
    %v25 = vld [vmem:[%s1 + $0x60] sm:$0xff]
    %v26 = vld [vmem:[%s1 + $0x68] sm:$0xff]
    %v27 = vld [vmem:[%s1 + $0x70] sm:$0xff]
    %v28 = vld [vmem:[%s1 + $0x78] sm:$0xff]
    %v29 = vld [vmem:[%s1 + $0x80] sm:$0xff]
    %v30 = vld [vmem:[%s1 + $0x88] sm:$0xff]
    %v31 = vld [vmem:[%s1 + $0x90] sm:$0xff]
    %v32 = vld [vmem:[%s1 + $0x98] sm:$0xff]
    %v33 = vld [vmem:[%s1 + $0xa0] sm:$0xff]
    %v34 = vld [vmem:[%s1 + $0xa8] sm:$0xff]
    %v35 = vld [vmem:[%s1 + $0xb0] sm:$0xff]
    %v36 = vld [vmem:[%s1 + $0xb8] sm:$0xff]
    %vm37 = vcmask 80896
    %v39 = vsel %vm37, %v12, 0
    %v42 = vsel %vm37, %v13, 0
    %v45 = vsel %vm37, %v14, 0
    %v48 = vsel %vm37, %v15, 0
    %v51 = vsel %vm37, %v16, 0
    %v54 = vsel %vm37, %v17, 0
    %v57 = vsel %vm37, %v18, 0
    %v60 = vsel %vm37, %v19, 0
    %v63 = vsel %vm37, %v20, 0
    %v66 = vsel %vm37, %v21, 0
    %v69 = vsel %vm37, %v22, 0
    %v72 = vsel %vm37, %v23, 0
    %v75 = vsel %vm37, %v24, 0
    %v78 = vsel %vm37, %v25, 0
    %v81 = vsel %vm37, %v26, 0
    %v84 = vsel %vm37, %v27, 0
    %v87 = vsel %vm37, %v28, 0
    %v90 = vsel %vm37, %v29, 0
    %v93 = vsel %vm37, %v30, 0
    %v96 = vsel %vm37, %v31, 0
    %v99 = vsel %vm37, %v32, 0
    %v102 = vsel %vm37, %v33, 0
    %v105 = vsel %vm37, %v34, 0
    %v108 = vsel %vm37, %v35, 0
    %v111 = vsel %vm37, %v36, 0
    %113 = vmatpush.xpose.msra.mxu0 %v87
    %114 = vmatpush.xpose.msra.mxu0 %v84
    %115 = vmatpush.xpose.msra.mxu0 %v81
    %116 = vmatpush.xpose.msra.mxu0 %v78
    %117 = vmatpush.xpose.msra.mxu0 %v75
    %118 = vmatpush.xpose.msra.mxu0 %v72
    %119 = vmatpush.xpose.msra.mxu0 %v69
    %120 = vmatpush.xpose.msra.mxu0 %v66
    %121 = vmatpush.xpose.msra.mxu0 %v63
    %122 = vmatpush.xpose.msra.mxu0 %v60
    %123 = vmatpush.xpose.msra.mxu0 %v57
    %124 = vmatpush.xpose.msra.mxu0 %v54
    %125 = vmatpush.xpose.msra.mxu0 %v51
    %126 = vmatpush.xpose.msra.mxu0 %v48
    %127 = vmatpush.xpose.msra.mxu0 %v45
    %128 = vmatpush.xpose.msra.mxu0 %v42
    %129 = vmatmul.f32.gmra.mxu0 %v39
    %v130 = vpop.f32.mrf.mxu0
    %v131 = vadd.f32 0.0, %v130
    %132 = vdwg.mxu0
    %133 = vmatpush.xpose.msra.mxu0 0.0
    %134 = vmatpush.xpose.msra.mxu0 0.0
    %135 = vmatpush.xpose.msra.mxu0 0.0
    %136 = vmatpush.xpose.msra.mxu0 0.0
    %137 = vmatpush.xpose.msra.mxu0 0.0
    %138 = vmatpush.xpose.msra.mxu0 0.0
    %139 = vmatpush.xpose.msra.mxu0 0.0
    %140 = vmatpush.xpose.msra.mxu0 0.0
    %141 = vmatpush.xpose.msra.mxu0 %v111
    %142 = vmatpush.xpose.msra.mxu0 %v108
    %143 = vmatpush.xpose.msra.mxu0 %v105
    %144 = vmatpush.xpose.msra.mxu0 %v102
    %145 = vmatpush.xpose.msra.mxu0 %v99
    %146 = vmatpush.xpose.msra.mxu0 %v96
    %147 = vmatpush.xpose.msra.mxu0 %v93
    %148 = vmatpush.xpose.msra.mxu0 %v90
    %149 = vmatmul.f32.gmra.mxu0 %v39
    %v150 = vpop.f32.mrf.mxu0
    %v151 = vadd.f32 0.0, %v150
    %152 = vdwg.mxu0
    %v155 = vrot.slane %v151, 6
    %vm156 = vcmask 1041408
    %v157 = vsel %vm156, %v131, %v155
    %vm159 = vcmask 519170
    %vm160 = vmor %vm159, %vm156
    %161 = vst.msk [vmem:[#allocation2] sm:$0xf] %vm160, %v157
    // Predicated region
    $region10: #{tpu_custom_call.1} parent=1 // pred_check
      _
    $region11: #{tpu_custom_call.1} parent=1 // pred_check_branch
      %163 = sbr.rel (0) target = $region13
    $region12: #{tpu_custom_call.1} parent=1 // pred_region
      %165 = vsyncadd [#allocation3], 0
      %s167 = sshll.u32 [#allocation2], 4
      %s168 = int_to_ptr.vmem [resolvable:$true] %s167
      %s169 = sshll.u32 %s2, 4
      %s170 = int_to_ptr.hbm [resolvable:$true] %s169
      %172 = dma.vmem_to_hbm [thread:$0]  %s168, 64, %s170, [#allocation3]
    $region13: #{tpu_custom_call.1} parent=1 // pred_fallthru
      _
    // Predicated region
    $region14: #{tpu_custom_call.1} parent=1 // pred_check
      _
    $region15: #{tpu_custom_call.1} parent=1 // pred_check_branch
      %174 = sbr.rel (0) target = $region17
    $region16: #{tpu_custom_call.1} parent=1 // pred_region
      %176 = dma.done [#allocation3], 64
    $region17: #{tpu_custom_call.1} parent=1 // pred_fallthru
      _
    %177 = vsyncpa [#allocation3], 1

</llo_original>
